<compile_context>
chip_gen: v5e
topology: v5e:2x2
jax: 0.10.0
libtpu: 0.0.40
codegen_flags: <defaults>
</compile_context>

<pallas_src>
import functools

import jax
import jax.numpy as jnp
from jax import lax
from jax.experimental import pallas as pl
from jax.experimental.pallas import tpu as pltpu


def _pskd_ce_kernel(logits_ref, targets_ref, per_row_ref, *, batch_size, block_rows):
    """One grid step: a (bt, C) tile -> (bt, 1) per-row losses (masked past B)."""
    i = pl.program_id(0)

    x = logits_ref[...].astype(jnp.float32)   # (bt, C)
    t = targets_ref[...].astype(jnp.float32)  # (bt, C)

    # Numerically-stable row-wise logsumexp; reuse the shifted logits for the
    # target term so only one (bt, C) f32 temporary stays live.
    m = jnp.max(x, axis=1, keepdims=True)                                 # (bt, 1)
    xm = x - m                                                            # (bt, C)
    lse_shift = jnp.log(jnp.sum(jnp.exp(xm), axis=1, keepdims=True))      # (bt, 1)
    t_sum = jnp.sum(t, axis=1, keepdims=True)                             # (bt, 1)
    txm_sum = jnp.sum(t * xm, axis=1, keepdims=True)                      # (bt, 1)

    # per_row = sum_c t_c * (lse - x_c) = -sum_c t_c * log_softmax(x)_c
    per_row = lse_shift * t_sum - txm_sum                                 # (bt, 1)

    # The last (partial) batch tile reads past the end of the unpadded inputs;
    # that data is garbage (possibly NaN/Inf). jnp.where selects 0 for those
    # rows instead of multiplying (which would propagate NaN).
    row = i * block_rows + lax.broadcasted_iota(jnp.int32, (block_rows, 1), 0)
    per_row_ref[...] = jnp.where(row < batch_size, per_row, 0.0)


def pskd_cross_entropy(logits, targets, *,
                       vmem_working_budget_bytes=24 * 1024 * 1024,
                       max_batch_tile=1024):
    """Pallas implementation of Custom_CrossEntropy_PSKD.forward.

    Args:
      logits:  (B, C) pre-softmax predictions (any float dtype, e.g. bf16/f32).
      targets: (B, C) soft labels.
    Returns:
      scalar f32 loss.
    """
    assert logits.ndim == 2 and logits.shape == targets.shape
    B, C = logits.shape

    # --- Honest VMEM-budget-driven batch tile -------------------------------
    # Double-buffered native-dtype DMA tiles for both inputs plus ~3 f32
    # (bt, C) elementwise temporaries inside the body.
    dma_bytes_per_row = 2 * C * (logits.dtype.itemsize + targets.dtype.itemsize)
    temp_bytes_per_row = 3 * 4 * C
    bt = vmem_working_budget_bytes // max(dma_bytes_per_row + temp_bytes_per_row, 1)
    bt = int(min(bt, max_batch_tile, pl.cdiv(B, 8) * 8))
    bt = max(8, (bt // 8) * 8)

    num_tiles = int(pl.cdiv(B, bt))

    kernel = functools.partial(_pskd_ce_kernel, batch_size=B, block_rows=bt)

    cost = pl.CostEstimate(
        flops=4 * B * C,
        transcendentals=B * C,
        bytes_accessed=(B * C * (logits.dtype.itemsize + targets.dtype.itemsize)
                        + num_tiles * bt * 4),
    )

    per_row = pl.pallas_call(
        kernel,
        out_shape=jax.ShapeDtypeStruct((num_tiles * bt, 1), jnp.float32),
        grid_spec=pltpu.PrefetchScalarGridSpec(
            num_scalar_prefetch=0,
            grid=(num_tiles,),
            in_specs=[
                # Class axis = full array dim (exempt from the 128 rule, no
                # host padding); batch axis in multiples of 8, partial last
                # tile masked in-kernel.
                pl.BlockSpec((bt, C), lambda i: (i, 0)),
                pl.BlockSpec((bt, C), lambda i: (i, 0)),
            ],
            out_specs=pl.BlockSpec((bt, 1), lambda i: (i, 0)),
        ),
        compiler_params=pltpu.CompilerParams(
            dimension_semantics=("parallel",),
            vmem_limit_bytes=48 * 1024 * 1024,   # safe on v7x's 64 MiB VMEM
        ),
        cost_estimate=cost,
    )(logits, targets)

    # Final reduce + mean(0).sum() normalization (/B) over <= num_tiles*bt
    # floats is a trivial XLA reduction.
    return jnp.sum(per_row) / jnp.float32(B)


def _reference(logits, targets):
    log_probs = jax.nn.log_softmax(logits.astype(jnp.float32), axis=1)
    return jnp.sum(jnp.mean(-targets.astype(jnp.float32) * log_probs, axis=0))


if __name__ == "__main__":
    key = jax.random.PRNGKey(0)
    k_logits, k_tgt = jax.random.split(key)

    B, C = 8, 32  # (batch_size, num_classes)
    logits = jax.random.normal(k_logits, (B, C), dtype=jnp.float32)
    # PSKD uses soft targets (mixture of one-hot + past predictions) -> a
    # probability distribution per row.
    targets = jax.nn.softmax(
        jax.random.normal(k_tgt, (B, C), dtype=jnp.float32), axis=1)

    loss = pskd_cross_entropy(logits, targets)
    jax.block_until_ready(loss)

    ref = _reference(logits, targets)
    assert jnp.allclose(loss, ref, rtol=1e-5, atol=1e-4), (loss, ref)
    print("KERNEL_OK")
</pallas_src>

<mosaic_0001>
module attributes {stable_mosaic.version = 11 : i64} {
  func.func @_pskd_ce_kernel(%arg0: i32, %arg1: memref<8x32xf32, #tpu.memory_space<vmem>>, %arg2: memref<8x32xf32, #tpu.memory_space<vmem>>, %arg3: memref<8x1xf32, #tpu.memory_space<vmem>>) attributes {dimension_semantics = [#tpu.dimension_semantics<parallel>], iteration_bounds = array<i64: 1>, scalar_prefetch = 0 : i64, scratch_operands = 0 : i64, tpu.core_type = #tpu.core_type<tc>, window_params = [{transform_indices = @transform_0, window_bounds = array<i64: 8, 32>}, {transform_indices = @transform_1, window_bounds = array<i64: 8, 32>}, {transform_indices = @transform_2, window_bounds = array<i64: 8, 1>}]} {
    %c0 = arith.constant 0 : index
    %c0_0 = arith.constant 0 : index
    %0 = vector.load %arg1[%c0, %c0_0] : memref<8x32xf32, #tpu.memory_space<vmem>>, vector<8x32xf32>
    %c0_1 = arith.constant 0 : index
    %c0_2 = arith.constant 0 : index
    %1 = vector.load %arg2[%c0_1, %c0_2] : memref<8x32xf32, #tpu.memory_space<vmem>>, vector<8x32xf32>
    %cst = arith.constant dense<0xFF800000> : vector<8xf32>
    %2 = vector.multi_reduction <maximumf>, %0, %cst [1] : vector<8x32xf32> to vector<8xf32>
    %3 = vector.shape_cast %2 : vector<8xf32> to vector<8x1xf32>
    %4 = vector.broadcast %3 : vector<8x1xf32> to vector<8x32xf32>
    %5 = arith.subf %0, %4 : vector<8x32xf32>
    %6 = math.exp %5 : vector<8x32xf32>
    %cst_3 = arith.constant dense<0.000000e+00> : vector<8xf32>
    %7 = vector.multi_reduction <add>, %6, %cst_3 [1] : vector<8x32xf32> to vector<8xf32>
    %8 = vector.shape_cast %7 : vector<8xf32> to vector<8x1xf32>
    %9 = math.log %8 : vector<8x1xf32>
    %cst_4 = arith.constant dense<0.000000e+00> : vector<8xf32>
    %10 = vector.multi_reduction <add>, %1, %cst_4 [1] : vector<8x32xf32> to vector<8xf32>
    %11 = vector.shape_cast %10 : vector<8xf32> to vector<8x1xf32>
    %12 = arith.mulf %1, %5 : vector<8x32xf32>
    %cst_5 = arith.constant dense<0.000000e+00> : vector<8xf32>
    %13 = vector.multi_reduction <add>, %12, %cst_5 [1] : vector<8x32xf32> to vector<8xf32>
    %14 = vector.shape_cast %13 : vector<8xf32> to vector<8x1xf32>
    %15 = arith.mulf %9, %11 : vector<8x1xf32>
    %16 = arith.subf %15, %14 : vector<8x1xf32>
    %c8_i32 = arith.constant 8 : i32
    %17 = arith.muli %arg0, %c8_i32 : i32
    %18 = tpu.iota {dimensions = array<i32: 0>} : vector<8x1xi32>
    %19 = vector.broadcast %17 : i32 to vector<8x1xi32>
    %20 = arith.addi %19, %18 : vector<8x1xi32>
    %c8_i32_6 = arith.constant 8 : i32
    %21 = vector.broadcast %c8_i32_6 : i32 to vector<8x1xi32>
    %22 = arith.cmpi slt, %20, %21 : vector<8x1xi32>
    %cst_7 = arith.constant 0.000000e+00 : f32
    %23 = vector.broadcast %cst_7 : f32 to vector<8x1xf32>
    %24 = arith.select %22, %16, %23 : vector<8x1xi1>, vector<8x1xf32>
    %c0_8 = arith.constant 0 : index
    %c0_9 = arith.constant 0 : index
    %25 = vector.load %arg3[%c0_8, %c0_9] : memref<8x1xf32, #tpu.memory_space<vmem>>, vector<8x1xf32>
    tpu.vector_store %arg3[%c0_8, %c0_9], %24 {strides = array<i32>} : memref<8x1xf32, #tpu.memory_space<vmem>>, vector<8x1xf32>,
    return
  }
  func.func @transform_0(%arg0: i32) -> (i32, i32) {
    %c0_i32 = arith.constant 0 : i32
    %c0_i32_0 = arith.constant 0 : i32
    return %arg0, %c0_i32 : i32, i32
  }
  func.func @transform_1(%arg0: i32) -> (i32, i32) {
    %c0_i32 = arith.constant 0 : i32
    %c0_i32_0 = arith.constant 0 : i32
    return %arg0, %c0_i32 : i32, i32
  }
  func.func @transform_2(%arg0: i32) -> (i32, i32) {
    %c0_i32 = arith.constant 0 : i32
    %c0_i32_0 = arith.constant 0 : i32
    return %arg0, %c0_i32 : i32, i32
  }
}

</mosaic_0001>

<llo_original>
// kernel: tpu_custom_call.1
$region0: #{tpu_custom_call.1}
  #allocation0 [shape = 'u32[]', space=smem, size = 0x4, offset = 0x4, fixed_abs, tag = 'smem constant byte address 0x4 - core index']
  #allocation1 [shape = 'u32[72,128]{1,0:T(1,128)}', space=vmem, size = 0x9000, scoped, tag = 'internal scratch']
  %s0 = inlined_call_operand.hbm [shape: f32[8,32], index: 0, kind: input, shape index: {}]
  %s1 = inlined_call_operand.hbm [shape: f32[8,32], index: 1, kind: input, shape index: {}]
  %s2 = inlined_call_operand.vmem [shape: f32[8,1], index: 2, kind: output, shape index: {}]
  %s3 = sld [smem:[#allocation0]]
  $region26: #{tpu_custom_call.1} parent=0
    _
  %s5 = ssub.s32 1, %s3
  %s6 = scalar_select 0, %s5, %s3
  $region1: #{tpu_custom_call.1} parent=0
    #allocation2 [shape = 'u8[4096]{0}', space=vmem, size = 0x1000, scoped, tag = 'input window, operand 0, single buffered']
    #allocation3 [shape = 's32[1]{0}', space=sflag, size = 0x4, scoped, tag = 'scoped memory for tpu_custom_call.1']
    #allocation4 [shape = 'u8[4096]{0}', space=vmem, size = 0x1000, scoped, tag = 'input window, operand 1, single buffered']
    #allocation5 [shape = 's32[1]{0}', space=sflag, size = 0x4, scoped, tag = 'scoped memory for tpu_custom_call.1']
    %7 = vsyncpa [#allocation3], 0
    %8 = vsyncpa [#allocation5], 0
    // Predicated region
    $region2: #{tpu_custom_call.1} parent=1 // pred_check
      _
    $region3: #{tpu_custom_call.1} parent=1 // pred_check_branch
      %10 = sbr.rel (0) target = $region5
    $region4: #{tpu_custom_call.1} parent=1 // pred_region
      %12 = vsyncadd [#allocation3], 0
      %s14 = sshll.u32 %s0, 4
      %s15 = int_to_ptr.hbm [resolvable:$true] %s14
      %s16 = sshll.u32 [#allocation2], 4
      %s17 = int_to_ptr.vmem [resolvable:$true] %s16
      %19 = dma.hbm_to_vmem [thread:$0]  %s15, 128, %s17, [#allocation3]
    $region5: #{tpu_custom_call.1} parent=1 // pred_fallthru
      _
    // Predicated region
    $region6: #{tpu_custom_call.1} parent=1 // pred_check
      _
    $region7: #{tpu_custom_call.1} parent=1 // pred_check_branch
      %21 = sbr.rel (0) target = $region9
    $region8: #{tpu_custom_call.1} parent=1 // pred_region
      %23 = vsyncadd [#allocation5], 0
      %s25 = sshll.u32 %s1, 4
      %s26 = int_to_ptr.hbm [resolvable:$true] %s25
      %s27 = sshll.u32 [#allocation4], 4
      %s28 = int_to_ptr.vmem [resolvable:$true] %s27
      %30 = dma.hbm_to_vmem [thread:$0]  %s26, 128, %s28, [#allocation5]
    $region9: #{tpu_custom_call.1} parent=1 // pred_fallthru
      _
    // Predicated region
    $region10: #{tpu_custom_call.1} parent=1 // pred_check
      _
    $region11: #{tpu_custom_call.1} parent=1 // pred_check_branch
      %32 = sbr.rel (0) target = $region13
    $region12: #{tpu_custom_call.1} parent=1 // pred_region
      %34 = dma.done [#allocation3], 128
    $region13: #{tpu_custom_call.1} parent=1 // pred_fallthru
      _
    // Predicated region
    $region14: #{tpu_custom_call.1} parent=1 // pred_check
      _
    $region15: #{tpu_custom_call.1} parent=1 // pred_check_branch
      %36 = sbr.rel (0) target = $region17
    $region16: #{tpu_custom_call.1} parent=1 // pred_region
      %38 = dma.done [#allocation5], 128
    $region17: #{tpu_custom_call.1} parent=1 // pred_fallthru
      _
    %v39 = vld [vmem:[#allocation2] sm:$0xff]
    %v40 = vld [vmem:[#allocation4] sm:$0xff]
    %vm41 = vcmask 261120
    %v42 = vsel %vm41, %v39, -inf
    %43 = vmax.xlane.f32.xlu0 %v42
    %v44 = vpop.xlane.xlu0 %43
    %v45 = vsub.f32 %v39, %v44
    %v46 = vmul.f32 %v45, 1.442695
    %v47 = vpow.pop %v46
    %v48 = vsel %vm41, %v47, 0.0
    %49 = vadd.xlane.f32.xlu0 %v48
    %v50 = vpop.xlane.xlu0 %49
    %v51 = vlog2.pop %v50
    %v52 = vmul.f32 %v51, 0.6931472
    %v53 = vsel %vm41, %v40, 0.0
    %54 = vadd.xlane.f32.xlu0 %v53
    %v55 = vpop.xlane.xlu0 %54
    %v56 = vmul.f32 %v40, %v45
    %v57 = vsel %vm41, %v56, 0.0
    %58 = vadd.xlane.f32.xlu0 %v57
    %v59 = vpop.xlane.xlu0 %58
    %v60 = vmul.f32 %v52, %v55
    %v61 = vsub.f32 %v60, %v59
    %s62 = smul.u32 0, 8
    %v63 = vlaneseq
    %v64 = vshrl.u32 %v63, 7
    %v65 = vstv %s62
    %v66 = vadd.s32 %v65, %v64
    %vm67 = vcmp.lt.s32.totalorder %v66, 8
    %v68 = vsel %vm67, %v61, 0.0
    %vm69 = vcmask 7168
    %70 = vst.msk [vmem:[%s2] sm:$0xff] %vm69, %v68
    // Predicated region
    $region18: #{tpu_custom_call.1} parent=1 // pred_check
      _
    $region19: #{tpu_custom_call.1} parent=1 // pred_check_branch
      %72 = sbr.rel (0) target = $region21
    $region20: #{tpu_custom_call.1} parent=1 // pred_region
      _
    $region21: #{tpu_custom_call.1} parent=1 // pred_fallthru
      _
    // Predicated region
    $region22: #{tpu_custom_call.1} parent=1 // pred_check
      _
    $region23: #{tpu_custom_call.1} parent=1 // pred_check_branch
      %74 = sbr.rel (0) target = $region25
    $region24: #{tpu_custom_call.1} parent=1 // pred_region
      _
    $region25: #{tpu_custom_call.1} parent=1 // pred_fallthru
      _
    %75 = vsyncpa [#allocation3], 1
    %76 = vsyncpa [#allocation5], 1

</llo_original>
